<compile_context>
chip_gen: v5e
topology: v5e:2x2
jax: 0.10.0
libtpu: 0.0.40
codegen_flags: <defaults>
</compile_context>

<pallas_src>
import functools

import jax
import jax.numpy as jnp
import numpy as np
from jax.experimental import pallas as pl
from jax.experimental.pallas import tpu as pltpu

_LANES = 128          # vreg lane width; partial-sum output blocks are lane-dense
_MAX_TILE_ROWS = 8192  # sanity cap (review: old 1024 cap was too small for small C)
_LIVE_F32_TEMPS = 10   # ~live f32 (TB, C) temporaries the kernel materializes


def _chip_config():
    """Chip-generation-aware VMEM limit and TensorCore split count."""
    kind = ""
    try:
        kind = (jax.devices()[0].device_kind or "").lower()
    except Exception:
        pass

    if "v7" in kind or "7x" in kind:
        # v7x: 64 MiB physical VMEM per TC, 2 TensorCores, 3.2 TB/s HBM.
        cfg = {"vmem_limit": 48 << 20, "n_splits": 2}
    else:
        # v5e / v6e: 128 MiB physical VMEM, single TensorCore.
        cfg = {"vmem_limit": 96 << 20, "n_splits": 1}

    # Defensive clamp against the actual physical VMEM when queryable.
    try:
        cap = int(pltpu.get_tpu_info().vmem_capacity_bytes)
        cfg["vmem_limit"] = min(cfg["vmem_limit"], (cap * 3) // 4)
    except Exception:
        pass
    return cfg


def _is_nonneg_int(v) -> bool:
    v = float(v)
    return v >= 0.0 and v.is_integer()


def _int_pow(x, n: int):
    """x**n for a static non-negative integer n via repeated squaring (VPU only)."""
    assert n >= 1
    result = None
    base = x
    while n > 0:
        if n & 1:
            result = base if result is None else result * base
        n >>= 1
        if n:
            base = base * base
    return result


def _cfl_kernel(eta_ref, x_ref, tgt_ref, out_ref, *,
                gamma_pos, gamma_neg, gamma_hc, eps, num_rows):
    c = pl.program_id(0)                        # "parallel" split axis
    i = pl.program_id(1)                        # "arbitrary" reduction axis

    @pl.when(i == 0)
    def _():
        out_ref[...] = jnp.zeros_like(out_ref)

    x = x_ref[...].astype(jnp.float32)          # (TB, C) logits
    tgt = tgt_ref[...]                          # (TB, 1) int32 class indices
    eta = eta_ref[0]                            # scalar from SMEM
    TB, C = x.shape

    # --- numerically-stable log_softmax; reuse exp(z) for the probabilities ---
    m = jnp.max(x, axis=-1, keepdims=True)
    z = x - m
    exp_z = jnp.exp(z)                          # single exp pass over (TB, C)
    sum_exp = jnp.sum(exp_z, axis=-1, keepdims=True)
    log_preds = z - jnp.log(sum_exp)            # (TB, C)
    # EUP reciprocal on the (TB, 1) column + one VPU multiply (no (TB,C) divide).
    p = exp_z * pl.reciprocal(sum_exp, approx=True)

    # --- one-hot targets via iota compare (scatter_ equivalent) ---
    col = jax.lax.broadcasted_iota(jnp.int32, (TB, C), 1)
    is_target = col == tgt                      # (TB, C) bool

    # --- asymmetric focal weight, specialized for static integer gammas ---
    #   base = 1 - p on the target class, p on the non-target classes
    #   exp  = gamma_pos on target, gamma_neg elsewhere
    if _is_nonneg_int(gamma_pos) and _is_nonneg_int(gamma_neg):
        gp, gn = int(gamma_pos), int(gamma_neg)
        pos_branch = 1.0 if gp == 0 else _int_pow(1.0 - p, gp)   # pow(x,0)==1
        neg_branch = 1.0 if gn == 0 else _int_pow(p, gn)
        asymmetric_w = jnp.where(is_target, pos_branch, neg_branch)
    else:
        base = jnp.where(is_target, 1.0 - p, p)
        base = jnp.maximum(base, 1e-30)          # guard 0**0 (torch.pow(0,0)==1)
        exponent = jnp.where(is_target, gamma_pos, gamma_neg)
        asymmetric_w = base ** exponent

    # --- positive (high-confidence) weight ---
    if float(gamma_hc) == 0.0:
        positive_w = None                        # identically 1.0
    elif _is_nonneg_int(gamma_hc):
        positive_w = jnp.where(is_target, _int_pow(1.0 + p, int(gamma_hc)), 1.0)
    else:
        targets_f = is_target.astype(jnp.float32)
        positive_w = (1.0 + p * targets_f) ** (gamma_hc * targets_f)

    one_minus_eta = 1.0 - eta                    # hoisted scalar
    if positive_w is None:
        w = one_minus_eta * asymmetric_w + eta
    else:
        w = one_minus_eta * asymmetric_w + eta * positive_w

    # --- label smoothing folded into one where; the minus sign is applied in
    #     the wrapper on the final scalar (keeps the negation off the VPU) ---
    smoothed = jnp.where(is_target, 1.0 - eps + eps / C, eps / C)
    prod = smoothed * (log_preds * w)            # (TB, C)
    row_sum = jnp.sum(prod, axis=-1, keepdims=True)   # (TB, 1)

    # --- padding mask only on tiles that actually straddle the batch end ---
    row_start = (c * pl.num_programs(1) + i) * TB
    needs_mask = row_start + TB > num_rows

    @pl.when(needs_mask)
    def _():
        row_idx = jax.lax.broadcasted_iota(jnp.int32, (TB, 1), 0) + row_start
        masked = jnp.where(row_idx < num_rows, row_sum, 0.0)
        out_ref[...] += jnp.sum(masked, axis=0, keepdims=True)

    @pl.when(jnp.logical_not(needs_mask))
    def _():
        out_ref[...] += jnp.sum(row_sum, axis=0, keepdims=True)


def cyclical_focal_loss(inputs, target, epoch, *,
                        gamma_pos=0.0, gamma_neg=4.0, gamma_hc=0.0,
                        eps=0.1, epochs=200, factor=2,
                        tile_rows=None, num_splits=None):
    """Pallas TPU implementation of Cyclical_FocalLoss.forward (reduction='mean')."""
    inputs = jnp.asarray(inputs)
    if inputs.dtype not in (jnp.float32, jnp.bfloat16):
        inputs = inputs.astype(jnp.float32)      # bf16 inputs are streamed as-is
    target = jnp.asarray(target)
    if target.ndim > 1:
        target = jnp.argmax(target, axis=1)      # glue, mirrors torch branch
    B, C = inputs.shape

    # --- eta schedule (pure scalar glue, mirrors the PyTorch branches) ---
    if factor * epoch < epochs:
        eta = 1.0 - factor * epoch / (epochs - 1)
    elif factor == 1.0:
        eta = 0.0
    else:
        eta = (factor * epoch / (epochs - 1) - 1.0) / (factor - 1.0)
    eta_arr = jnp.asarray([eta], dtype=jnp.float32)

    cfg = _chip_config()

    # --- tile sizing from a FULL VMEM budget (streamed blocks + f32 temps) ---
    dtype_bytes = inputs.dtype.itemsize
    sub = 16 if inputs.dtype == jnp.bfloat16 else 8
    batch_rounded = max(sub, ((B + sub - 1) // sub) * sub)
    # Per-row footprint: 2x double-buffered streamed logit row + the live f32
    # (TB, C) temporaries (cast-to-f32 included) + tiny per-row scalars.
    bytes_per_row = C * (2 * dtype_bytes + _LIVE_F32_TEMPS * 4) + 64
    budget = cfg["vmem_limit"] // 2              # leave headroom for compiler scratch
    if tile_rows is None:
        tile_rows = budget // bytes_per_row
        tile_rows = min(tile_rows, _MAX_TILE_ROWS, batch_rounded)
    tile_rows = max(sub, (int(tile_rows) // sub) * sub)

    steps_total = (B + tile_rows - 1) // tile_rows
    if num_splits is None:
        num_splits = cfg["n_splits"]
    n_splits = num_splits if steps_total > 1 else 1
    steps_per_split = (steps_total + n_splits - 1) // n_splits
    b_pad = n_splits * steps_per_split * tile_rows

    if b_pad != B:
        inputs = jnp.pad(inputs, ((0, b_pad - B), (0, 0)))
        target = jnp.pad(target, (0, b_pad - B))
    tgt2d = target.astype(jnp.int32).reshape(-1, 1)

    kernel = functools.partial(
        _cfl_kernel,
        gamma_pos=float(gamma_pos), gamma_neg=float(gamma_neg),
        gamma_hc=float(gamma_hc), eps=float(eps), num_rows=B)

    cost = pl.CostEstimate(
        flops=20 * b_pad * C,
        transcendentals=b_pad * C + 2 * b_pad,   # one exp/element + log & rcp per row
        bytes_accessed=b_pad * C * dtype_bytes + b_pad * 4 + n_splits * _LANES * 4)

    out = pl.pallas_call(
        kernel,
        out_shape=jax.ShapeDtypeStruct((1, _LANES * n_splits), jnp.float32),
        grid_spec=pltpu.PrefetchScalarGridSpec(
            num_scalar_prefetch=1,               # eta lands in SMEM
            grid=(n_splits, steps_per_split),
            in_specs=[
                pl.BlockSpec((tile_rows, C),
                             lambda c, i, eta: (c * steps_per_split + i, 0)),
                pl.BlockSpec((tile_rows, 1),
                             lambda c, i, eta: (c * steps_per_split + i, 0)),
            ],
            out_specs=pl.BlockSpec((1, _LANES), lambda c, i, eta: (0, c)),
        ),
        compiler_params=pltpu.CompilerParams(
            dimension_semantics=("parallel", "arbitrary"),
            vmem_limit_bytes=cfg["vmem_limit"]),
        cost_estimate=cost,
    )(eta_arr, inputs, tgt2d)

    # Each split's (1, 128) block holds its partial sum replicated across lanes.
    partials = out.reshape(n_splits, _LANES)[:, 0]
    # The kernel accumulates +smoothed*log_preds*w; negate once here (mean).
    return -jnp.sum(partials) / B


def _reference(inputs, target, epoch, *, gamma_pos=0.0, gamma_neg=4.0,
               gamma_hc=0.0, eps=0.1, epochs=200, factor=2):
    """Plain-JAX reference for correctness checks (mirrors the torch module)."""
    inputs = jnp.asarray(inputs, jnp.float32)
    C = inputs.shape[-1]
    log_preds = jax.nn.log_softmax(inputs, axis=-1)
    targets = jax.nn.one_hot(target, C, dtype=jnp.float32)
    if factor * epoch < epochs:
        eta = 1.0 - factor * epoch / (epochs - 1)
    elif factor == 1.0:
        eta = 0.0
    else:
        eta = (factor * epoch / (epochs - 1) - 1.0) / (factor - 1.0)
    anti = 1.0 - targets
    xs_pos = jnp.exp(log_preds)
    xs_neg = 1.0 - xs_pos
    xs_pos = xs_pos * targets
    xs_neg = xs_neg * anti
    asym_w = (1.0 - xs_pos - xs_neg) ** (gamma_pos * targets + gamma_neg * anti)
    pos_w = (1.0 + xs_pos) ** (gamma_hc * targets)
    lp = log_preds * ((1.0 - eta) * asym_w + eta * pos_w)
    smoothed = targets * (1.0 - eps) + eps / C
    return jnp.mean(jnp.sum(-(smoothed * lp), axis=-1))


if __name__ == "__main__":
    key = jax.random.PRNGKey(0)
    k1, k2, k3, k4 = jax.random.split(key, 4)

    # Case 1: small batch not a multiple of the sublane tile -> exercises the
    # boundary-tile padding mask with a single grid step (batch=12, classes=32).
    b1, c1, epoch1 = 12, 32, 10
    logits1 = jax.random.normal(k1, (b1, c1), dtype=jnp.float32)
    target1 = jax.random.randint(k2, (b1,), 0, c1, dtype=jnp.int32)
    loss1 = jax.block_until_ready(cyclical_focal_loss(logits1, target1, epoch1))
    ref1 = _reference(logits1, target1, epoch1)
    np.testing.assert_allclose(np.asarray(loss1), np.asarray(ref1),
                               rtol=1e-4, atol=1e-4)

    # Case 2: multiple grid steps + forced 2-way split via explicit small tile
    # (batch=50, tile_rows=8 -> 2 splits x 4 steps, 14 padded rows, eta branch 3).
    b2, c2, epoch2 = 50, 32, 150
    logits2 = jax.random.normal(k3, (b2, c2), dtype=jnp.float32)
    target2 = jax.random.randint(k4, (b2,), 0, c2, dtype=jnp.int32)
    loss2 = jax.block_until_ready(
        cyclical_focal_loss(logits2, target2, epoch2, tile_rows=8, num_splits=2))
    ref2 = _reference(logits2, target2, epoch2)
    np.testing.assert_allclose(np.asarray(loss2), np.asarray(ref2),
                               rtol=1e-4, atol=1e-4)

    # Case 3: non-default integer gammas (exercises the pos/neg int-pow branches
    # and the gamma_hc positive_w path) with a mid-schedule eta.
    loss3 = jax.block_until_ready(
        cyclical_focal_loss(logits2, target2, 50,
                            gamma_pos=2, gamma_neg=3, gamma_hc=1))
    ref3 = _reference(logits2, target2, 50,
                      gamma_pos=2, gamma_neg=3, gamma_hc=1)
    np.testing.assert_allclose(np.asarray(loss3), np.asarray(ref3),
                               rtol=1e-3, atol=1e-3)

    print("KERNEL_OK")
</pallas_src>

<mosaic_0001>
module attributes {stable_mosaic.version = 11 : i64} {
  func.func @_cfl_kernel(%arg0: i32, %arg1: i32, %arg2: memref<1xf32, #tpu.memory_space<smem>>, %arg3: memref<16x32xf32, #tpu.memory_space<vmem>>, %arg4: memref<16x1xi32, #tpu.memory_space<vmem>>, %arg5: memref<1x128xf32, #tpu.memory_space<vmem>>) attributes {dimension_semantics = [#tpu.dimension_semantics<parallel>, #tpu.dimension_semantics<arbitrary>], iteration_bounds = array<i64: 1, 1>, scalar_prefetch = 1 : i64, scratch_operands = 0 : i64, tpu.core_type = #tpu.core_type<tc>, window_params = [{transform_indices = @transform_0, window_bounds = array<i64: 16, 32>}, {transform_indices = @transform_1, window_bounds = array<i64: 16, 1>}, {transform_indices = @transform_2, window_bounds = array<i64: 1, 128>}]} {
    %c0_i32 = arith.constant 0 : i32
    %0 = arith.cmpi eq, %arg1, %c0_i32 : i32
    %1 = arith.extui %0 : i1 to i32
    %c0_i32_0 = arith.constant 0 : i32
    %2 = arith.cmpi ne, %1, %c0_i32_0 : i32
    scf.if %2 {
      %cst_14 = arith.constant 0.000000e+00 : f32
      %48 = vector.broadcast %cst_14 : f32 to vector<1x128xf32>
      %c0_15 = arith.constant 0 : index
      %c0_16 = arith.constant 0 : index
      %49 = vector.load %arg5[%c0_15, %c0_16] : memref<1x128xf32, #tpu.memory_space<vmem>>, vector<1x128xf32>
      tpu.vector_store %arg5[%c0_15, %c0_16], %48 {strides = array<i32>} : memref<1x128xf32, #tpu.memory_space<vmem>>, vector<1x128xf32>,
    } else {
    }
    %c0 = arith.constant 0 : index
    %c0_1 = arith.constant 0 : index
    %3 = vector.load %arg3[%c0, %c0_1] : memref<16x32xf32, #tpu.memory_space<vmem>>, vector<16x32xf32>
    %c0_2 = arith.constant 0 : index
    %c0_3 = arith.constant 0 : index
    %4 = vector.load %arg4[%c0_2, %c0_3] : memref<16x1xi32, #tpu.memory_space<vmem>>, vector<16x1xi32>
    %c0_4 = arith.constant 0 : index
    %5 = memref.load %arg2[%c0_4] : memref<1xf32, #tpu.memory_space<smem>>
    %cst = arith.constant dense<0xFF800000> : vector<16xf32>
    %6 = vector.multi_reduction <maximumf>, %3, %cst [1] : vector<16x32xf32> to vector<16xf32>
    %7 = vector.shape_cast %6 : vector<16xf32> to vector<16x1xf32>
    %8 = vector.broadcast %7 : vector<16x1xf32> to vector<16x32xf32>
    %9 = arith.subf %3, %8 : vector<16x32xf32>
    %10 = math.exp %9 : vector<16x32xf32>
    %cst_5 = arith.constant dense<0.000000e+00> : vector<16xf32>
    %11 = vector.multi_reduction <add>, %10, %cst_5 [1] : vector<16x32xf32> to vector<16xf32>
    %12 = vector.shape_cast %11 : vector<16xf32> to vector<16x1xf32>
    %13 = math.log %12 : vector<16x1xf32>
    %14 = vector.broadcast %13 : vector<16x1xf32> to vector<16x32xf32>
    %15 = arith.subf %9, %14 : vector<16x32xf32>
    %16 = tpu.reciprocal %12 {approx = true} : vector<16x1xf32> -> vector<16x1xf32>
    %17 = vector.broadcast %16 : vector<16x1xf32> to vector<16x32xf32>
    %18 = arith.mulf %10, %17 : vector<16x32xf32>
    %19 = tpu.iota {dimensions = array<i32: 1>} : vector<16x32xi32>
    %20 = vector.broadcast %4 : vector<16x1xi32> to vector<16x32xi32>
    %21 = arith.cmpi eq, %19, %20 : vector<16x32xi32>
    %22 = arith.mulf %18, %18 : vector<16x32xf32>
    %23 = arith.mulf %22, %22 : vector<16x32xf32>
    %cst_6 = arith.constant 1.000000e+00 : f32
    %24 = vector.broadcast %cst_6 : f32 to vector<16x32xf32>
    %25 = arith.select %21, %24, %23 : vector<16x32xi1>, vector<16x32xf32>
    %cst_7 = arith.constant 1.000000e+00 : f32
    %26 = arith.subf %cst_7, %5 : f32
    %27 = vector.broadcast %26 : f32 to vector<16x32xf32>
    %28 = arith.mulf %27, %25 : vector<16x32xf32>
    %29 = vector.broadcast %5 : f32 to vector<16x32xf32>
    %30 = arith.addf %28, %29 : vector<16x32xf32>
    %cst_8 = arith.constant 0.903124988 : f32
    %cst_9 = arith.constant 3.125000e-03 : f32
    %31 = vector.broadcast %cst_8 : f32 to vector<16x32xf32>
    %32 = vector.broadcast %cst_9 : f32 to vector<16x32xf32>
    %33 = arith.select %21, %31, %32 : vector<16x32xi1>, vector<16x32xf32>
    %34 = arith.mulf %15, %30 : vector<16x32xf32>
    %35 = arith.mulf %33, %34 : vector<16x32xf32>
    %cst_10 = arith.constant dense<0.000000e+00> : vector<16xf32>
    %36 = vector.multi_reduction <add>, %35, %cst_10 [1] : vector<16x32xf32> to vector<16xf32>
    %37 = vector.shape_cast %36 : vector<16xf32> to vector<16x1xf32>
    %c1_i32 = arith.constant 1 : i32
    %38 = arith.muli %arg0, %c1_i32 : i32
    %39 = arith.addi %38, %arg1 : i32
    %c16_i32 = arith.constant 16 : i32
    %40 = arith.muli %39, %c16_i32 : i32
    %c16_i32_11 = arith.constant 16 : i32
    %41 = arith.addi %40, %c16_i32_11 : i32
    %c12_i32 = arith.constant 12 : i32
    %42 = arith.cmpi sgt, %41, %c12_i32 : i32
    %43 = arith.extui %42 : i1 to i32
    %c0_i32_12 = arith.constant 0 : i32
    %44 = arith.cmpi ne, %43, %c0_i32_12 : i32
    scf.if %44 {
      %48 = tpu.iota {dimensions = array<i32: 0>} : vector<16x1xi32>
      %49 = vector.broadcast %40 : i32 to vector<16x1xi32>
      %50 = arith.addi %48, %49 : vector<16x1xi32>
      %c12_i32_14 = arith.constant 12 : i32
      %51 = vector.broadcast %c12_i32_14 : i32 to vector<16x1xi32>
      %52 = arith.cmpi slt, %50, %51 : vector<16x1xi32>
      %cst_15 = arith.constant 0.000000e+00 : f32
      %53 = vector.broadcast %cst_15 : f32 to vector<16x1xf32>
      %54 = arith.select %52, %37, %53 : vector<16x1xi1>, vector<16x1xf32>
      %c0_16 = arith.constant 0 : index
      %c0_17 = arith.constant 0 : index
      %55 = vector.load %arg5[%c0_16, %c0_17] : memref<1x128xf32, #tpu.memory_space<vmem>>, vector<1x128xf32>
      %cst_18 = arith.constant dense<0.000000e+00> : vector<1xf32>
      %56 = vector.multi_reduction <add>, %54, %cst_18 [0] : vector<16x1xf32> to vector<1xf32>
      %57 = vector.shape_cast %56 : vector<1xf32> to vector<1x1xf32>
      %58 = vector.broadcast %57 : vector<1x1xf32> to vector<1x128xf32>
      %59 = arith.addf %55, %58 : vector<1x128xf32>
      %c0_19 = arith.constant 0 : index
      %c0_20 = arith.constant 0 : index
      %60 = vector.load %arg5[%c0_19, %c0_20] : memref<1x128xf32, #tpu.memory_space<vmem>>, vector<1x128xf32>
      tpu.vector_store %arg5[%c0_19, %c0_20], %59 {strides = array<i32>} : memref<1x128xf32, #tpu.memory_space<vmem>>, vector<1x128xf32>,
    } else {
    }
    %true = arith.constant true
    %45 = arith.xori %42, %true : i1
    %46 = arith.extui %45 : i1 to i32
    %c0_i32_13 = arith.constant 0 : i32
    %47 = arith.cmpi ne, %46, %c0_i32_13 : i32
    scf.if %47 {
      %c0_14 = arith.constant 0 : index
      %c0_15 = arith.constant 0 : index
      %48 = vector.load %arg5[%c0_14, %c0_15] : memref<1x128xf32, #tpu.memory_space<vmem>>, vector<1x128xf32>
      %cst_16 = arith.constant dense<0.000000e+00> : vector<1xf32>
      %49 = vector.multi_reduction <add>, %37, %cst_16 [0] : vector<16x1xf32> to vector<1xf32>
      %50 = vector.shape_cast %49 : vector<1xf32> to vector<1x1xf32>
      %51 = vector.broadcast %50 : vector<1x1xf32> to vector<1x128xf32>
      %52 = arith.addf %48, %51 : vector<1x128xf32>
      %c0_17 = arith.constant 0 : index
      %c0_18 = arith.constant 0 : index
      %53 = vector.load %arg5[%c0_17, %c0_18] : memref<1x128xf32, #tpu.memory_space<vmem>>, vector<1x128xf32>
      tpu.vector_store %arg5[%c0_17, %c0_18], %52 {strides = array<i32>} : memref<1x128xf32, #tpu.memory_space<vmem>>, vector<1x128xf32>,
    } else {
    }
    return
  }
  func.func @transform_0(%arg0: i32, %arg1: i32, %arg2: memref<1xf32, #tpu.memory_space<smem>>) -> (i32, i32) {
    %c1_i32 = arith.constant 1 : i32
    %0 = arith.muli %arg0, %c1_i32 : i32
    %1 = arith.addi %0, %arg1 : i32
    %c0_i32 = arith.constant 0 : i32
    %c0_i32_0 = arith.constant 0 : i32
    return %1, %c0_i32 : i32, i32
  }
  func.func @transform_1(%arg0: i32, %arg1: i32, %arg2: memref<1xf32, #tpu.memory_space<smem>>) -> (i32, i32) {
    %c1_i32 = arith.constant 1 : i32
    %0 = arith.muli %arg0, %c1_i32 : i32
    %1 = arith.addi %0, %arg1 : i32
    %c0_i32 = arith.constant 0 : i32
    %c0_i32_0 = arith.constant 0 : i32
    return %1, %c0_i32 : i32, i32
  }
  func.func @transform_2(%arg0: i32, %arg1: i32, %arg2: memref<1xf32, #tpu.memory_space<smem>>) -> (i32, i32) {
    %c0_i32 = arith.constant 0 : i32
    %c0_i32_0 = arith.constant 0 : i32
    return %c0_i32, %arg0 : i32, i32
  }
}

</mosaic_0001>

<llo_original>
// kernel: tpu_custom_call.1
$region0: #{tpu_custom_call.1}
  #allocation0 [shape = 'u32[]', space=smem, size = 0x4, offset = 0x4, fixed_abs, tag = 'smem constant byte address 0x4 - core index']
  #allocation1 [shape = 'u32[72,128]{1,0:T(1,128)}', space=vmem, size = 0x9000, scoped, tag = 'internal scratch']
  #allocation2 [shape = 's32[1]{0}', space=sflag, size = 0x4, scoped, tag = 'scoped memory for tpu_custom_call.1']
  #allocation3 [shape = 'f32[1]{0:T(128)S(6)}', space=smem, size = 0x200, scoped, tag = 'prefetched SMEM operand 0']
  %s0 = inlined_call_operand.<no memory space> [shape: f32[1], index: 0, kind: input, shape index: {}]
  %s1 = inlined_call_operand.vmem [shape: f32[16,32], index: 1, kind: input, shape index: {}]
  %s2 = inlined_call_operand.vmem [shape: s32[16,1], index: 2, kind: input, shape index: {}]
  %s3 = inlined_call_operand.hbm [shape: f32[1,128], index: 3, kind: output, shape index: {}]
  %s4 = sld [smem:[#allocation0]]
  $region30: #{tpu_custom_call.1} parent=0
    _
  %s6 = ssub.s32 1, %s4
  %s7 = scalar_select 0, %s6, %s4
  %8 = sst [smem:[#allocation3]] %s0
  $region1: #{tpu_custom_call.1} parent=0
    #allocation4 [shape = 'u8[512]{0}', space=vmem, size = 0x400, scoped, tag = 'output window, operand 0, single buffered']
    #allocation5 [shape = 's32[1]{0}', space=sflag, size = 0x4, scoped, tag = 'scoped memory for tpu_custom_call.1']
    %9 = vsyncpa [#allocation5], 0
    // Predicated region
    $region2: #{tpu_custom_call.1} parent=1 // pred_check
      _
    $region3: #{tpu_custom_call.1} parent=1 // pred_check_branch
      %11 = sbr.rel (0) target = $region5
    $region4: #{tpu_custom_call.1} parent=1 // pred_region
      %s12 = sadd.s32 0, 0
      %s13 = smul.u32 2, %s12
      %p14 = scmp.lt.s32.totalorder %s13, 1
      %s15 = scalar_select %p14, %s13, 1
      %s16 = smul.addr %s15, 8
      %s17 = scalar_lea.vmem %s1, %s16
      %s18 = sadd.s32 0, 0
      %s19 = smul.u32 2, %s18
    $region5: #{tpu_custom_call.1} parent=1 // pred_fallthru
      _
    // Predicated region
    $region6: #{tpu_custom_call.1} parent=1 // pred_check
      _
    $region7: #{tpu_custom_call.1} parent=1 // pred_check_branch
      %21 = sbr.rel (0) target = $region9
    $region8: #{tpu_custom_call.1} parent=1 // pred_region
      %s22 = sadd.s32 0, 0
      %s23 = smul.u32 2, %s22
      %p24 = scmp.lt.s32.totalorder %s23, 1
      %s25 = scalar_select %p24, %s23, 1
      %s26 = smul.addr %s25, 8
      %s27 = scalar_lea.vmem %s2, %s26
      %s28 = sadd.s32 0, 0
      %s29 = smul.u32 2, %s28
    $region9: #{tpu_custom_call.1} parent=1 // pred_fallthru
      _
    %s30 = sadd.s32 0, 0
    %s31 = smul.u32 2, %s30
    %p32 = scmp.lt.s32.totalorder %s31, 1
    %s33 = scalar_select %p32, %s31, 1
    %s34 = smul.addr %s33, 8
    %s35 = scalar_lea.vmem %s1, %s34
    %s36 = sadd.s32 0, 0
    %s37 = smul.u32 2, %s36
    %p38 = scmp.lt.s32.totalorder %s37, 1
    %s39 = scalar_select %p38, %s37, 1
    %s40 = smul.addr %s39, 8
    %s41 = scalar_lea.vmem %s2, %s40
    %s42 = sadd.s32 0, 0
    %s43 = smul.u32 2, %s42
    %p44 = scmp.lt.s32.totalorder %s43, 1
    %s45 = scalar_select %p44, %s43, 1
    %s46 = smul.addr %s45, 8
    %s47 = scalar_lea.vmem %s1, %s46
    %s48 = sadd.s32 0, 0
    %s49 = smul.u32 2, %s48
    %s50 = sadd.s32 0, 0
    %s51 = smul.u32 2, %s50
    %p52 = scmp.lt.s32.totalorder %s51, 1
    %s53 = scalar_select %p52, %s51, 1
    %s54 = smul.addr %s53, 8
    %s55 = scalar_lea.vmem %s2, %s54
    %s56 = sadd.s32 0, 0
    %s57 = smul.u32 2, %s56
    %p58 = scmp.eq.s32.totalorder 0, 0
    // Predicated region
    $region10: #{tpu_custom_call.1} parent=1 // pred_check
      %p59 = pneg %p58
    $region11: #{tpu_custom_call.1} parent=1 // pred_check_branch
      %61 = sbr.rel (%p59) target = $region13
    $region12: #{tpu_custom_call.1} parent=1 // pred_region
      %62 = vst [vmem:[#allocation4] sm:$0x1] 0.0
    $region13: #{tpu_custom_call.1} parent=1 // pred_fallthru
      _
    %v63 = vld [vmem:[%s47] sm:$0xff]
    %v64 = vld [vmem:[%s47 + $0x8] sm:$0xff]
    %v65 = vld [vmem:[%s55] sm:$0xff]
    %v66 = vld [vmem:[%s55 + $0x8] sm:$0xff]
    %s67 = sld [smem:[#allocation3]]
    %vm68 = vcmask 261120
    %v69 = vsel %vm68, %v63, -inf
    %70 = vmax.xlane.f32.xlu0 %v69
    %v71 = vpop.xlane.xlu0 %70
    %v72 = vsel %vm68, %v64, -inf
    %73 = vmax.xlane.f32.xlu0 %v72
    %v74 = vpop.xlane.xlu0 %73
    %v75 = vsub.f32 %v63, %v71
    %v76 = vsub.f32 %v64, %v74
    %v77 = vmul.f32 %v75, 1.442695
    %v78 = vpow.pop %v77
    %v79 = vmul.f32 %v76, 1.442695
    %v80 = vpow.pop %v79
    %v81 = vsel %vm68, %v78, 0.0
    %82 = vadd.xlane.f32.xlu0 %v81
    %v83 = vpop.xlane.xlu0 %82
    %v84 = vsel %vm68, %v80, 0.0
    %85 = vadd.xlane.f32.xlu0 %v84
    %v86 = vpop.xlane.xlu0 %85
    %v87 = vlog2.pop %v83
    %v88 = vmul.f32 %v87, 0.6931472
    %v89 = vlog2.pop %v86
    %v90 = vmul.f32 %v89, 0.6931472
    %v91 = vsub.f32 %v75, %v88
    %v92 = vsub.f32 %v76, %v90
    %v93 = vrcp.pop %v83
    %v94 = vrcp.pop %v86
    %v95 = vmul.f32 %v78, %v93
    %v96 = vmul.f32 %v80, %v94
    %v97 = vlaneseq
    %v98 = vand.u32 %v97, 127
    %99 = vset.pattern.permute.xlu0 0
    %100 = vperm.xlu0 %99, %v65
    %v101 = vpop.permute.xlu0 %100
    %102 = vset.pattern.permute.xlu0 0
    %103 = vperm.xlu0 %102, %v66
    %v104 = vpop.permute.xlu0 %103
    %vm105 = vcmp.eq.s32.totalorder %v98, %v101
    %vm106 = vcmp.eq.s32.totalorder %v98, %v104
    %v107 = vmul.f32 %v95, %v95
    %v108 = vmul.f32 %v96, %v96
    %v109 = vmul.f32 %v107, %v107
    %v110 = vmul.f32 %v108, %v108
    %v111 = vsel %vm105, 1.0, %v109
    %v112 = vsel %vm106, 1.0, %v110
    %s113 = ssub.f32 1.0, %s67
    %v114 = vstv %s113
    %v115 = vmul.f32 %v114, %v111
    %v116 = vmul.f32 %v114, %v112
    %v117 = vstv %s67
    %v118 = vadd.f32 %v115, %v117
    %v119 = vadd.f32 %v116, %v117
    %v120 = vsel %vm105, 0.903125, 0.003125
    %v121 = vsel %vm106, 0.903125, 0.003125
    %v122 = vmul.f32 %v91, %v118
    %v123 = vmul.f32 %v92, %v119
    %v124 = vmul.f32 %v120, %v122
    %v125 = vmul.f32 %v121, %v123
    %v126 = vsel %vm68, %v124, 0.0
    %127 = vadd.xlane.f32.xlu0 %v126
    %v128 = vpop.xlane.xlu0 %127
    %v129 = vsel %vm68, %v125, 0.0
    %130 = vadd.xlane.f32.xlu0 %v129
    %v131 = vpop.xlane.xlu0 %130
    %s132 = sadd.s32 0, 0
    %s133 = smul.u32 %s132, 16
    %s134 = sadd.s32 %s133, 16
    %p135 = scmp.gt.s32.totalorder %s134, 12
    // Predicated region
    $region14: #{tpu_custom_call.1} parent=1 // pred_check
      %p136 = pneg %p135
    $region15: #{tpu_custom_call.1} parent=1 // pred_check_branch
      %138 = sbr.rel (%p136) target = $region17
    $region16: #{tpu_custom_call.1} parent=1 // pred_region
      %v139 = vlaneseq
      %v140 = vshrl.u32 %v139, 7
      %v141 = vadd.s32 %v140, 8
      %v142 = vstv %s133
      %v143 = vadd.s32 %v140, %v142
      %v144 = vadd.s32 %v141, %v142
      %vm145 = vcmp.lt.s32.totalorder %v143, 12
      %vm146 = vcmp.lt.s32.totalorder %v144, 12
      %v147 = vsel %vm145, %v128, 0.0
      %v148 = vsel %vm146, %v131, 0.0
      %v149 = vld [vmem:[#allocation4] sm:$0x1]
      %v150 = vadd.f32 %v147, %v148
      %v151 = vrot.slane %v150, 4
      %v152 = vadd.f32 %v150, %v151
      %v153 = vrot.slane %v152, 2
      %v154 = vadd.f32 %v152, %v153
      %v155 = vrot.slane %v154, 1
      %v156 = vadd.f32 %v154, %v155
      %v157 = vadd.f32 %v149, %v156
      %158 = vst [vmem:[#allocation4] sm:$0x1] %v157
    $region17: #{tpu_custom_call.1} parent=1 // pred_fallthru
      _
    %p159 = scmp.le.s32.totalorder %s134, 12
    // Predicated region
    $region18: #{tpu_custom_call.1} parent=1 // pred_check
      %p160 = pneg %p159
    $region19: #{tpu_custom_call.1} parent=1 // pred_check_branch
      %162 = sbr.rel (%p160) target = $region21
    $region20: #{tpu_custom_call.1} parent=1 // pred_region
      %v163 = vld [vmem:[#allocation4] sm:$0x1]
      %v164 = vadd.f32 %v128, %v131
      %v165 = vrot.slane %v164, 4
      %v166 = vadd.f32 %v164, %v165
      %v167 = vrot.slane %v166, 2
      %v168 = vadd.f32 %v166, %v167
      %v169 = vrot.slane %v168, 1
      %v170 = vadd.f32 %v168, %v169
      %v171 = vadd.f32 %v163, %v170
      %172 = vst [vmem:[#allocation4] sm:$0x1] %v171
    $region21: #{tpu_custom_call.1} parent=1 // pred_fallthru
      _
    // Predicated region
    $region22: #{tpu_custom_call.1} parent=1 // pred_check
      _
    $region23: #{tpu_custom_call.1} parent=1 // pred_check_branch
      %174 = sbr.rel (0) target = $region25
    $region24: #{tpu_custom_call.1} parent=1 // pred_region
      %176 = vsyncadd [#allocation5], 0
      %s178 = sshll.u32 [#allocation4], 4
      %s179 = int_to_ptr.vmem [resolvable:$true] %s178
      %s180 = sshll.u32 %s3, 4
      %s181 = int_to_ptr.hbm [resolvable:$true] %s180
      %183 = dma.vmem_to_hbm [thread:$0]  %s179, 16, %s181, [#allocation5]
    $region25: #{tpu_custom_call.1} parent=1 // pred_fallthru
      _
    // Predicated region
    $region26: #{tpu_custom_call.1} parent=1 // pred_check
      _
    $region27: #{tpu_custom_call.1} parent=1 // pred_check_branch
      %185 = sbr.rel (0) target = $region29
    $region28: #{tpu_custom_call.1} parent=1 // pred_region
      %187 = dma.done [#allocation5], 16
    $region29: #{tpu_custom_call.1} parent=1 // pred_fallthru
      _
    %188 = vsyncpa [#allocation5], 1

</llo_original>
